<compile_context>
chip_gen: v7x
topology: tpu7x:2x2x1
jax: 0.10.0
libtpu: 0.0.40
codegen_flags: <defaults>
</compile_context>

<pallas_src>
import functools

import numpy as np
import jax
import jax.numpy as jnp
from jax.experimental import pallas as pl
from jax.experimental.pallas import tpu as pltpu

MAX_TILE_PIX = 2048        # lane-axis pixel tile cap (multiple of 128)
CLAMP = 0.8                # InvBlock clamp
VMEM_LIMIT = 32 * 1024 * 1024


# ----------------------------------------------------------------------------
# Pallas kernels (channels on sublanes, pixels on lanes)
# ----------------------------------------------------------------------------
def _invblock_kernel(x_ref, w1_ref, w2_ref, wf_ref, bf_ref, wh_ref, bh_ref,
                     wg_ref, bg_ref, o_ref, *, s1, clamp):
    """Fused InvBlock forward on a (C, TILE_PIX) slab of one batch element.

    x_ref/o_ref blocks are (1, C, T); weights are tiny full-extent blocks.
    All 1x1 convs are W @ X matmuls (contraction over channels only, so
    pixel columns are independent — ragged tail columns never contaminate
    valid ones).
    """
    x = x_ref[0].astype(jnp.float32)                       # (C, T)

    # InvertibleConv1x1 (dense CxC weight, rows pre-split into the two halves;
    # logdet is discarded by InvBlock.forward so it is not computed).
    x1 = jnp.dot(w1_ref[...], x, preferred_element_type=jnp.float32)   # (s1,T)
    x2 = jnp.dot(w2_ref[...], x, preferred_element_type=jnp.float32)   # (s2,T)

    # y1 = x1 + F(x2)
    y1 = x1 + jnp.dot(wf_ref[...], x2,
                      preferred_element_type=jnp.float32) + bf_ref[...]

    # s = clamp * (sigmoid(H(y1)) * 2 - 1) == clamp * tanh(H(y1) / 2)
    h = jnp.dot(wh_ref[...], y1,
                preferred_element_type=jnp.float32) + bh_ref[...]
    s = clamp * jnp.tanh(0.5 * h)

    # y2 = x2 * exp(s) + G(y1)
    g = jnp.dot(wg_ref[...], y1,
                preferred_element_type=jnp.float32) + bg_ref[...]
    y2 = x2 * jnp.exp(s) + g

    # Direct slice writes into the output block (no in-kernel concat).
    o_ref[0, :s1, :] = y1.astype(o_ref.dtype)
    o_ref[0, s1:, :] = y2.astype(o_ref.dtype)


def _fuse_kernel(y1_ref, y2_ref, y3_ref, w1_ref, w2_ref, w3_ref, b_ref, o_ref):
    """fuse = Conv2d(3C, C, 1): out = W1@y1 + W2@y2 + W3@y3 + b (concat fused)."""
    acc = jnp.dot(w1_ref[...], y1_ref[0].astype(jnp.float32),
                  preferred_element_type=jnp.float32)
    acc = acc + jnp.dot(w2_ref[...], y2_ref[0].astype(jnp.float32),
                        preferred_element_type=jnp.float32)
    acc = acc + jnp.dot(w3_ref[...], y3_ref[0].astype(jnp.float32),
                        preferred_element_type=jnp.float32)
    o_ref[0, :, :] = (acc + b_ref[...]).astype(o_ref.dtype)


# ----------------------------------------------------------------------------
# pallas_call wrappers (no pad, no transpose — reshape only)
# ----------------------------------------------------------------------------
def _pick_tile(pix):
    # full extent is always a legal block; otherwise a multiple of 128 with a
    # ragged last block (Pallas masks the writeback of the tail columns).
    return pix if pix <= MAX_TILE_PIX else MAX_TILE_PIX


def _wspec(arr):
    # tiny full-extent parameter block, resident in VMEM across grid steps
    return pl.BlockSpec(arr.shape, lambda b, i: (0, 0))


def invblock_pallas(x_nchw, p):
    """One InvBlock forward (rev=False), NCHW in / NCHW out."""
    n, c, h, w = x_nchw.shape
    pix = h * w
    x3 = x_nchw.reshape(n, c, pix)
    tile = _pick_tile(pix)
    grid = (n, pl.cdiv(pix, tile))

    def x_map(b, i):
        return (b, 0, i)

    kernel = functools.partial(_invblock_kernel, s1=p["split1"], clamp=CLAMP)
    out = pl.pallas_call(
        kernel,
        out_shape=jax.ShapeDtypeStruct((n, c, pix), x_nchw.dtype),
        grid=grid,
        in_specs=[pl.BlockSpec((1, c, tile), x_map),
                  _wspec(p["winv1"]), _wspec(p["winv2"]),
                  _wspec(p["wf"]), _wspec(p["bf"]),
                  _wspec(p["wh"]), _wspec(p["bh"]),
                  _wspec(p["wg"]), _wspec(p["bg"])],
        out_specs=pl.BlockSpec((1, c, tile), x_map),
        compiler_params=pltpu.CompilerParams(
            dimension_semantics=("parallel", "parallel"),
            vmem_limit_bytes=VMEM_LIMIT),
    )(x3, p["winv1"], p["winv2"], p["wf"], p["bf"],
      p["wh"], p["bh"], p["wg"], p["bg"])
    return out.reshape(n, c, h, w)


def fuse_pallas(y1, y2, y3, p):
    """nn.Conv2d(3*C, C, 1, 1, 0) over the (never materialized) channel concat."""
    n, c, h, w = y1.shape
    pix = h * w
    tile = _pick_tile(pix)
    grid = (n, pl.cdiv(pix, tile))

    def x_map(b, i):
        return (b, 0, i)

    out = pl.pallas_call(
        _fuse_kernel,
        out_shape=jax.ShapeDtypeStruct((n, c, pix), y1.dtype),
        grid=grid,
        in_specs=[pl.BlockSpec((1, c, tile), x_map),
                  pl.BlockSpec((1, c, tile), x_map),
                  pl.BlockSpec((1, c, tile), x_map),
                  _wspec(p["wfuse1"]), _wspec(p["wfuse2"]),
                  _wspec(p["wfuse3"]), _wspec(p["bfuse"])],
        out_specs=pl.BlockSpec((1, c, tile), x_map),
        compiler_params=pltpu.CompilerParams(
            dimension_semantics=("parallel", "parallel"),
            vmem_limit_bytes=VMEM_LIMIT),
    )(y1.reshape(n, c, pix), y2.reshape(n, c, pix), y3.reshape(n, c, pix),
      p["wfuse1"], p["wfuse2"], p["wfuse3"], p["bfuse"])
    return out.reshape(n, c, h, w)


# ----------------------------------------------------------------------------
# Bilinear interpolation (PyTorch F.interpolate, mode='bilinear',
# align_corners=False) — 2-tap gather + lerp per axis, plain-JAX glue.
# ----------------------------------------------------------------------------
def _interp_idx(out_size, in_size):
    scale = in_size / out_size
    i = np.arange(out_size, dtype=np.float64)
    src = np.maximum((i + 0.5) * scale - 0.5, 0.0)
    i0 = np.minimum(np.floor(src).astype(np.int64), in_size - 1)
    i1 = np.minimum(i0 + 1, in_size - 1)
    frac = (src - i0).astype(np.float32)
    return jnp.asarray(i0), jnp.asarray(i1), jnp.asarray(frac)


def bilinear_resize(x_nchw, out_h, out_w):
    _, _, h, w = x_nchw.shape
    r0, r1, fh = _interp_idx(out_h, h)
    c0, c1, fw = _interp_idx(out_w, w)
    fh = fh[None, None, :, None]
    fw = fw[None, None, None, :]
    xr = x_nchw[:, :, r0, :] * (1.0 - fh) + x_nchw[:, :, r1, :] * fh
    return xr[:, :, :, c0] * (1.0 - fw) + xr[:, :, :, c1] * fw


# ----------------------------------------------------------------------------
# Parameters (deterministic, synthetic)
# ----------------------------------------------------------------------------
def init_params(key, channel_num, channel_split_num):
    s1 = channel_split_num
    s2 = channel_num - s1
    ks = jax.random.split(key, 9)

    # TODO(synk): InvertibleConv1x1(LU_decomposed=True) init: the P/L/U/s
    # factors multiply back to a dense orthogonal CxC matrix; build it directly.
    w0 = jax.random.normal(ks[0], (channel_num, channel_num), jnp.float32)
    winv, _ = jnp.linalg.qr(w0)

    def conv1x1(kw, kb, cin, cout):
        bound = 1.0 / np.sqrt(cin)
        w = jax.random.uniform(kw, (cout, cin), jnp.float32, -bound, bound)
        b = jax.random.uniform(kb, (cout, 1), jnp.float32, -bound, bound)
        return w, b

    # TODO(synk): subnet_constructor is not defined in the reference file;
    # using a Conv2d(in, out, kernel=1, bias=True) subnet for F, G, H.
    wf, bf = conv1x1(ks[1], ks[2], s2, s1)          # F: s2 -> s1
    wg, bg = conv1x1(ks[3], ks[4], s1, s2)          # G: s1 -> s2
    wh, bh = conv1x1(ks[5], ks[6], s1, s2)          # H: s1 -> s2
    wfuse, bfuse = conv1x1(ks[7], ks[8], 3 * channel_num, channel_num)

    c = channel_num
    return {
        "split1": s1,
        "winv1": winv[:s1, :], "winv2": winv[s1:, :],
        "wf": wf, "bf": bf,
        "wg": wg, "bg": bg,
        "wh": wh, "bh": bh,
        # fuse weight pre-split into the three per-branch (C, C) blocks so the
        # channel concat never hits HBM.
        "wfuse1": wfuse[:, :c], "wfuse2": wfuse[:, c:2 * c],
        "wfuse3": wfuse[:, 2 * c:], "bfuse": bfuse,
    }


# ----------------------------------------------------------------------------
# InvBlockMscale forward
# ----------------------------------------------------------------------------
def invblock_mscale_forward(x, params):
    n, c, h, w = x.shape
    x1 = x
    x2 = bilinear_resize(x1, h // 2, w // 2)     # scale_factor=0.5
    x3 = bilinear_resize(x1, h // 4, w // 4)     # scale_factor=0.25

    y1 = invblock_pallas(x1, params)
    y2 = invblock_pallas(x2, params)
    y3 = invblock_pallas(x3, params)

    y2 = bilinear_resize(y2, h, w)
    y3 = bilinear_resize(y3, h, w)

    return fuse_pallas(y1, y2, y3, params)       # concat + 1x1 conv, fused


if __name__ == "__main__":
    key = jax.random.PRNGKey(0)
    kx, kp = jax.random.split(key)

    N, C, H, W = 2, 4, 16, 16
    channel_split_num = 2

    x = jax.random.normal(kx, (N, C, H, W), jnp.float32)
    params = init_params(kp, C, channel_split_num)

    out = invblock_mscale_forward(x, params)
    out = jax.block_until_ready(out)
    assert out.shape == (N, C, H, W), out.shape
    assert bool(jnp.all(jnp.isfinite(out)))
    print("KERNEL_OK")
</pallas_src>

<mosaic_0001>
module attributes {stable_mosaic.version = 11 : i64} {
  func.func @_invblock_kernel(%arg0: i32, %arg1: i32, %arg2: memref<1x4x256xf32, #tpu.memory_space<vmem>>, %arg3: memref<2x4xf32, #tpu.memory_space<vmem>>, %arg4: memref<2x4xf32, #tpu.memory_space<vmem>>, %arg5: memref<2x2xf32, #tpu.memory_space<vmem>>, %arg6: memref<2x1xf32, #tpu.memory_space<vmem>>, %arg7: memref<2x2xf32, #tpu.memory_space<vmem>>, %arg8: memref<2x1xf32, #tpu.memory_space<vmem>>, %arg9: memref<2x2xf32, #tpu.memory_space<vmem>>, %arg10: memref<2x1xf32, #tpu.memory_space<vmem>>, %arg11: memref<1x4x256xf32, #tpu.memory_space<vmem>>) attributes {dimension_semantics = [#tpu.dimension_semantics<parallel>, #tpu.dimension_semantics<parallel>], iteration_bounds = array<i64: 2, 1>, scalar_prefetch = 0 : i64, scratch_operands = 0 : i64, tpu.core_type = #tpu.core_type<tc>, window_params = [{transform_indices = @transform_0, window_bounds = array<i64: 1, 4, 256>}, {pipeline_mode = #tpu.pipeline_mode<synchronous>, transform_indices = @transform_1, window_bounds = array<i64: 2, 4>}, {pipeline_mode = #tpu.pipeline_mode<synchronous>, transform_indices = @transform_2, window_bounds = array<i64: 2, 4>}, {pipeline_mode = #tpu.pipeline_mode<synchronous>, transform_indices = @transform_3, window_bounds = array<i64: 2, 2>}, {pipeline_mode = #tpu.pipeline_mode<synchronous>, transform_indices = @transform_4, window_bounds = array<i64: 2, 1>}, {pipeline_mode = #tpu.pipeline_mode<synchronous>, transform_indices = @transform_5, window_bounds = array<i64: 2, 2>}, {pipeline_mode = #tpu.pipeline_mode<synchronous>, transform_indices = @transform_6, window_bounds = array<i64: 2, 1>}, {pipeline_mode = #tpu.pipeline_mode<synchronous>, transform_indices = @transform_7, window_bounds = array<i64: 2, 2>}, {pipeline_mode = #tpu.pipeline_mode<synchronous>, transform_indices = @transform_8, window_bounds = array<i64: 2, 1>}, {transform_indices = @transform_9, window_bounds = array<i64: 1, 4, 256>}]} {
    %c0 = arith.constant 0 : index
    %c0_0 = arith.constant 0 : index
    %c0_1 = arith.constant 0 : index
    %0 = vector.load %arg2[%c0, %c0_0, %c0_1] : memref<1x4x256xf32, #tpu.memory_space<vmem>>, vector<1x4x256xf32>
    %1 = vector.shape_cast %0 : vector<1x4x256xf32> to vector<4x256xf32>
    %c0_2 = arith.constant 0 : index
    %c0_3 = arith.constant 0 : index
    %2 = vector.load %arg3[%c0_2, %c0_3] : memref<2x4xf32, #tpu.memory_space<vmem>>, vector<2x4xf32>
    %cst = arith.constant dense<0.000000e+00> : vector<2x256xf32>
    %3 = tpu.matmul %2, %1, %cst {dimension_numbers = #tpu.dot_dimension_numbers<[1], [0], [0], [1], [0, 0, 1, 1], [], []>} : vector<2x4xf32>, vector<4x256xf32>, vector<2x256xf32> -> vector<2x256xf32>
    %c0_4 = arith.constant 0 : index
    %c0_5 = arith.constant 0 : index
    %4 = vector.load %arg4[%c0_4, %c0_5] : memref<2x4xf32, #tpu.memory_space<vmem>>, vector<2x4xf32>
    %cst_6 = arith.constant dense<0.000000e+00> : vector<2x256xf32>
    %5 = tpu.matmul %4, %1, %cst_6 {dimension_numbers = #tpu.dot_dimension_numbers<[1], [0], [0], [1], [0, 0, 1, 1], [], []>} : vector<2x4xf32>, vector<4x256xf32>, vector<2x256xf32> -> vector<2x256xf32>
    %c0_7 = arith.constant 0 : index
    %c0_8 = arith.constant 0 : index
    %6 = vector.load %arg5[%c0_7, %c0_8] : memref<2x2xf32, #tpu.memory_space<vmem>>, vector<2x2xf32>
    %cst_9 = arith.constant dense<0.000000e+00> : vector<2x256xf32>
    %7 = tpu.matmul %6, %5, %cst_9 {dimension_numbers = #tpu.dot_dimension_numbers<[1], [0], [0], [1], [0, 0, 1, 1], [], []>} : vector<2x2xf32>, vector<2x256xf32>, vector<2x256xf32> -> vector<2x256xf32>
    %8 = arith.addf %3, %7 : vector<2x256xf32>
    %c0_10 = arith.constant 0 : index
    %c0_11 = arith.constant 0 : index
    %9 = vector.load %arg6[%c0_10, %c0_11] : memref<2x1xf32, #tpu.memory_space<vmem>>, vector<2x1xf32>
    %10 = vector.broadcast %9 : vector<2x1xf32> to vector<2x256xf32>
    %11 = arith.addf %8, %10 : vector<2x256xf32>
    %c0_12 = arith.constant 0 : index
    %c0_13 = arith.constant 0 : index
    %12 = vector.load %arg7[%c0_12, %c0_13] : memref<2x2xf32, #tpu.memory_space<vmem>>, vector<2x2xf32>
    %cst_14 = arith.constant dense<0.000000e+00> : vector<2x256xf32>
    %13 = tpu.matmul %12, %11, %cst_14 {dimension_numbers = #tpu.dot_dimension_numbers<[1], [0], [0], [1], [0, 0, 1, 1], [], []>} : vector<2x2xf32>, vector<2x256xf32>, vector<2x256xf32> -> vector<2x256xf32>
    %c0_15 = arith.constant 0 : index
    %c0_16 = arith.constant 0 : index
    %14 = vector.load %arg8[%c0_15, %c0_16] : memref<2x1xf32, #tpu.memory_space<vmem>>, vector<2x1xf32>
    %15 = vector.broadcast %14 : vector<2x1xf32> to vector<2x256xf32>
    %16 = arith.addf %13, %15 : vector<2x256xf32>
    %cst_17 = arith.constant 5.000000e-01 : f32
    %17 = vector.broadcast %cst_17 : f32 to vector<2x256xf32>
    %18 = arith.mulf %17, %16 : vector<2x256xf32>
    %19 = math.tanh %18 : vector<2x256xf32>
    %cst_18 = arith.constant 8.000000e-01 : f32
    %20 = vector.broadcast %cst_18 : f32 to vector<2x256xf32>
    %21 = arith.mulf %20, %19 : vector<2x256xf32>
    %c0_19 = arith.constant 0 : index
    %c0_20 = arith.constant 0 : index
    %22 = vector.load %arg9[%c0_19, %c0_20] : memref<2x2xf32, #tpu.memory_space<vmem>>, vector<2x2xf32>
    %cst_21 = arith.constant dense<0.000000e+00> : vector<2x256xf32>
    %23 = tpu.matmul %22, %11, %cst_21 {dimension_numbers = #tpu.dot_dimension_numbers<[1], [0], [0], [1], [0, 0, 1, 1], [], []>} : vector<2x2xf32>, vector<2x256xf32>, vector<2x256xf32> -> vector<2x256xf32>
    %c0_22 = arith.constant 0 : index
    %c0_23 = arith.constant 0 : index
    %24 = vector.load %arg10[%c0_22, %c0_23] : memref<2x1xf32, #tpu.memory_space<vmem>>, vector<2x1xf32>
    %25 = vector.broadcast %24 : vector<2x1xf32> to vector<2x256xf32>
    %26 = arith.addf %23, %25 : vector<2x256xf32>
    %27 = math.exp %21 : vector<2x256xf32>
    %28 = arith.mulf %5, %27 : vector<2x256xf32>
    %29 = arith.addf %28, %26 : vector<2x256xf32>
    %c0_24 = arith.constant 0 : index
    %c0_25 = arith.constant 0 : index
    %c0_26 = arith.constant 0 : index
    %30 = vector.load %arg11[%c0_24, %c0_25, %c0_26] : memref<1x4x256xf32, #tpu.memory_space<vmem>>, vector<1x2x256xf32>
    %31 = vector.shape_cast %30 : vector<1x2x256xf32> to vector<2x256xf32>
    %32 = vector.shape_cast %11 : vector<2x256xf32> to vector<1x2x256xf32>
    tpu.vector_store %arg11[%c0_24, %c0_25, %c0_26], %32 {strides = array<i32>} : memref<1x4x256xf32, #tpu.memory_space<vmem>>, vector<1x2x256xf32>,
    %c0_27 = arith.constant 0 : index
    %c2 = arith.constant 2 : index
    %c0_28 = arith.constant 0 : index
    %33 = vector.load %arg11[%c0_27, %c2, %c0_28] : memref<1x4x256xf32, #tpu.memory_space<vmem>>, vector<1x2x256xf32>
    %34 = vector.shape_cast %33 : vector<1x2x256xf32> to vector<2x256xf32>
    %35 = vector.shape_cast %29 : vector<2x256xf32> to vector<1x2x256xf32>
    tpu.vector_store %arg11[%c0_27, %c2, %c0_28], %35 {strides = array<i32>} : memref<1x4x256xf32, #tpu.memory_space<vmem>>, vector<1x2x256xf32>,
    return
  }
  func.func @transform_0(%arg0: i32, %arg1: i32) -> (i32, i32, i32) {
    %c0_i32 = arith.constant 0 : i32
    %c0_i32_0 = arith.constant 0 : i32
    return %arg0, %c0_i32, %arg1 : i32, i32, i32
  }
  func.func @transform_1(%arg0: i32, %arg1: i32) -> (i32, i32) {
    %c0_i32 = arith.constant 0 : i32
    %c0_i32_0 = arith.constant 0 : i32
    %c0_i32_1 = arith.constant 0 : i32
    return %c0_i32, %c0_i32_0 : i32, i32
  }
  func.func @transform_2(%arg0: i32, %arg1: i32) -> (i32, i32) {
    %c0_i32 = arith.constant 0 : i32
    %c0_i32_0 = arith.constant 0 : i32
    %c0_i32_1 = arith.constant 0 : i32
    return %c0_i32, %c0_i32_0 : i32, i32
  }
  func.func @transform_3(%arg0: i32, %arg1: i32) -> (i32, i32) {
    %c0_i32 = arith.constant 0 : i32
    %c0_i32_0 = arith.constant 0 : i32
    %c0_i32_1 = arith.constant 0 : i32
    return %c0_i32, %c0_i32_0 : i32, i32
  }
  func.func @transform_4(%arg0: i32, %arg1: i32) -> (i32, i32) {
    %c0_i32 = arith.constant 0 : i32
    %c0_i32_0 = arith.constant 0 : i32
    %c0_i32_1 = arith.constant 0 : i32
    return %c0_i32, %c0_i32_0 : i32, i32
  }
  func.func @transform_5(%arg0: i32, %arg1: i32) -> (i32, i32) {
    %c0_i32 = arith.constant 0 : i32
    %c0_i32_0 = arith.constant 0 : i32
    %c0_i32_1 = arith.constant 0 : i32
    return %c0_i32, %c0_i32_0 : i32, i32
  }
  func.func @transform_6(%arg0: i32, %arg1: i32) -> (i32, i32) {
    %c0_i32 = arith.constant 0 : i32
    %c0_i32_0 = arith.constant 0 : i32
    %c0_i32_1 = arith.constant 0 : i32
    return %c0_i32, %c0_i32_0 : i32, i32
  }
  func.func @transform_7(%arg0: i32, %arg1: i32) -> (i32, i32) {
    %c0_i32 = arith.constant 0 : i32
    %c0_i32_0 = arith.constant 0 : i32
    %c0_i32_1 = arith.constant 0 : i32
    return %c0_i32, %c0_i32_0 : i32, i32
  }
  func.func @transform_8(%arg0: i32, %arg1: i32) -> (i32, i32) {
    %c0_i32 = arith.constant 0 : i32
    %c0_i32_0 = arith.constant 0 : i32
    %c0_i32_1 = arith.constant 0 : i32
    return %c0_i32, %c0_i32_0 : i32, i32
  }
  func.func @transform_9(%arg0: i32, %arg1: i32) -> (i32, i32, i32) {
    %c0_i32 = arith.constant 0 : i32
    %c0_i32_0 = arith.constant 0 : i32
    return %arg0, %c0_i32, %arg1 : i32, i32, i32
  }
}

</mosaic_0001>

<llo_original>
// kernel: tpu_custom_call.1
$region0: #{tpu_custom_call.1}
  #allocation0 [shape = 'u32[]', space=smem, size = 0x4, offset = 0x4, fixed_abs, tag = 'smem constant byte address 0x4 - core index']
  #allocation1 [shape = 'u32[144,128]{1,0:T(1,128)}', space=vmem, size = 0x12000, scoped, tag = 'internal scratch']
  %s0 = inlined_call_operand.hbm [shape: f32[2,4,256], index: 0, kind: input, shape index: {}]
  %s1 = inlined_call_operand.vmem [shape: f32[2,4], index: 1, kind: input, shape index: {}]
  %s2 = inlined_call_operand.vmem [shape: f32[2,4], index: 2, kind: input, shape index: {}]
  %s3 = inlined_call_operand.vmem [shape: f32[2,2], index: 3, kind: input, shape index: {}]
  %s4 = inlined_call_operand.vmem [shape: f32[2,1], index: 4, kind: input, shape index: {}]
  %s5 = inlined_call_operand.vmem [shape: f32[2,2], index: 5, kind: input, shape index: {}]
  %s6 = inlined_call_operand.vmem [shape: f32[2,1], index: 6, kind: input, shape index: {}]
  %s7 = inlined_call_operand.vmem [shape: f32[2,2], index: 7, kind: input, shape index: {}]
  %s8 = inlined_call_operand.vmem [shape: f32[2,1], index: 8, kind: input, shape index: {}]
  %s9 = inlined_call_operand.hbm [shape: f32[2,4,256], index: 9, kind: output, shape index: {}]
  %s10 = sld [smem:[#allocation0]]
  $region73: #{tpu_custom_call.1} parent=0
    _
  %s12 = ssub.s32 1, %s10
  %s13 = scalar_select 0, %s12, %s10
  $region1: #{tpu_custom_call.1} parent=0
    #allocation2 [shape = 'u8[8192]{0}', space=vmem, size = 0x2000, scoped, tag = 'input window, operand 0']
    #allocation3 [shape = 's32[2]{0}', space=sflag, size = 0x8, scoped, tag = 'scoped memory for tpu_custom_call.1']
    #allocation4 [shape = 's32[2]{0}', space=sflag, size = 0x8, scoped, tag = 'scoped memory for tpu_custom_call.1']
    #allocation5 [shape = 'u8[8192]{0}', space=vmem, size = 0x2000, scoped, tag = 'output window, operand 0']
    %14 = vsyncpa [#allocation3], 0
    %s15 = scalar_lea.sflag [#allocation3], 1
    %16 = vsyncpa %s15, 0
    %17 = vsyncpa [#allocation4], 0
    %s18 = scalar_lea.sflag [#allocation4], 1
    %19 = vsyncpa %s18, 0
    loop: start=0, step=1, limit=4
    $region2: #{tpu_custom_call.1} parent=1 // loop_pre_header
      _
    $region3: #{tpu_custom_call.1} parent=1 // loop_header
      %s21 = sphi 0, %s25
      %p22 = scmp.ge.s32.totalorder %s21, 4
      %s28 = sphi 0, %s40
      %s29 = sphi 0, %s36
      %s30 = sphi 0, %s28
      %s31 = sphi 0, %s29
      %s32 = sphi 0, %s30
      %s33 = sphi 0, %s31
      %s45 = sphi 0, %s47
      %s48 = sphi 0, %s45
      %s49 = sphi 0, %s48
      %s65 = sphi 0, %s49
      %s69 = sphi 0, %s69
      %s71 = sphi 0, %s69
      %s72 = sphi 0, %s71
      %s86 = sphi 0, %s72
      %s90 = sphi 0, %s90
      %s92 = sphi 0, %s90
      %s93 = sphi 0, %s92
      %s107 = sphi 0, %s93
      %s111 = sphi 0, %s111
      %s113 = sphi 0, %s111
      %s114 = sphi 0, %s113
      %s128 = sphi 0, %s114
      %s132 = sphi 0, %s132
      %s134 = sphi 0, %s132
      %s135 = sphi 0, %s134
      %s149 = sphi 0, %s135
      %s153 = sphi 0, %s153
      %s155 = sphi 0, %s153
      %s156 = sphi 0, %s155
      %s170 = sphi 0, %s156
      %s174 = sphi 0, %s174
      %s176 = sphi 0, %s174
      %s177 = sphi 0, %s176
      %s191 = sphi 0, %s177
      %s195 = sphi 0, %s195
      %s197 = sphi 0, %s195
      %s198 = sphi 0, %s197
      %s212 = sphi 0, %s198
      %s216 = sphi 0, %s216
      %s218 = sphi 0, %s216
      %s219 = sphi 0, %s218
      %s233 = sphi 0, %s219
      %s241 = sphi 0, %s243
      %s244 = sphi 0, %s241
      %s245 = sphi 0, %s244
      %s261 = sphi 0, %s245
    $region4: #{tpu_custom_call.1} parent=1 // loop_header_branch
      %24 = sbr.rel (%p22) target = $region8
    $region5: #{tpu_custom_call.1} parent=1 // loop_body
      %s26 = ssub.s32 %s21, 1
      %s27 = ssub.s32 %s21, 2
      %s34 = sadd.s32 1, %s29
      %p35 = scmp.ge.s32.totalorder %s34, 1
      %s36 = scalar_select %p35, 0, %s34
      %s37 = sadd.s32 1, %s28
      %s38 = scalar_select %p35, %s37, %s28
      %p39 = scmp.ge.s32.totalorder %s38, 2
      %s40 = scalar_select %p39, 0, %s38
      %s41 = ssub.s32 %s28, %s40
      %s42 = ssub.s32 %s29, %s36
      %s43 = sor.u32 %s41, %s42
      %p44 = scmp.eq.s32.totalorder %s43, 0
      %s46 = sadd.s32 %s45, 1
      %s47 = scalar_select %p44, %s45, %s46
      %p50 = pneg %p44
      %p51 = scmp.eq.s32.totalorder %s21, 1
      %p52 = por %p50, %p51
      %p53 = scmp.ne.s32.totalorder %s45, %s48
      %p54 = scmp.eq.s32.totalorder %s21, 0
      %p55 = por %p53, %p54
      %p56 = scmp.ne.s32.totalorder %s45, %s48
      %p57 = scmp.eq.s32.totalorder %s26, 1
      %p58 = por %p56, %p57
      %p59 = scmp.ne.s32.totalorder %s48, %s49
      %p60 = scmp.eq.s32.totalorder %s26, 0
      %p61 = por %p59, %p60
      %p62 = scmp.ne.s32.totalorder %s48, %s49
      %p63 = scmp.eq.s32.totalorder %s27, 1
      %p64 = por %p62, %p63
      %p66 = scmp.ne.s32.totalorder %s49, %s65
      %p67 = scmp.eq.s32.totalorder %s27, 0
      %p68 = por %p66, %p67
      %s70 = sadd.s32 %s69, 1
      %p73 = scmp.eq.s32.totalorder %s21, 1
      %p74 = scmp.ne.s32.totalorder %s69, %s71
      %p75 = scmp.eq.s32.totalorder %s21, 0
      %p76 = por %p74, %p75
      %p77 = scmp.ne.s32.totalorder %s69, %s71
      %p78 = scmp.eq.s32.totalorder %s26, 1
      %p79 = por %p77, %p78
      %p80 = scmp.ne.s32.totalorder %s71, %s72
      %p81 = scmp.eq.s32.totalorder %s26, 0
      %p82 = por %p80, %p81
      %p83 = scmp.ne.s32.totalorder %s71, %s72
      %p84 = scmp.eq.s32.totalorder %s27, 1
      %p85 = por %p83, %p84
      %p87 = scmp.ne.s32.totalorder %s72, %s86
      %p88 = scmp.eq.s32.totalorder %s27, 0
      %p89 = por %p87, %p88
      %s91 = sadd.s32 %s90, 1
      %p94 = scmp.eq.s32.totalorder %s21, 1
      %p95 = scmp.ne.s32.totalorder %s90, %s92
      %p96 = scmp.eq.s32.totalorder %s21, 0
      %p97 = por %p95, %p96
      %p98 = scmp.ne.s32.totalorder %s90, %s92
      %p99 = scmp.eq.s32.totalorder %s26, 1
      %p100 = por %p98, %p99
      %p101 = scmp.ne.s32.totalorder %s92, %s93
      %p102 = scmp.eq.s32.totalorder %s26, 0
      %p103 = por %p101, %p102
      %p104 = scmp.ne.s32.totalorder %s92, %s93
      %p105 = scmp.eq.s32.totalorder %s27, 1
      %p106 = por %p104, %p105
      %p108 = scmp.ne.s32.totalorder %s93, %s107
      %p109 = scmp.eq.s32.totalorder %s27, 0
      %p110 = por %p108, %p109
      %s112 = sadd.s32 %s111, 1
      %p115 = scmp.eq.s32.totalorder %s21, 1
      %p116 = scmp.ne.s32.totalorder %s111, %s113
      %p117 = scmp.eq.s32.totalorder %s21, 0
      %p118 = por %p116, %p117
      %p119 = scmp.ne.s32.totalorder %s111, %s113
      %p120 = scmp.eq.s32.totalorder %s26, 1
      %p121 = por %p119, %p120
      %p122 = scmp.ne.s32.totalorder %s113, %s114
      %p123 = scmp.eq.s32.totalorder %s26, 0
      %p124 = por %p122, %p123
      %p125 = scmp.ne.s32.totalorder %s113, %s114
      %p126 = scmp.eq.s32.totalorder %s27, 1
      %p127 = por %p125, %p126
      %p129 = scmp.ne.s32.totalorder %s114, %s128
      %p130 = scmp.eq.s32.totalorder %s27, 0
      %p131 = por %p129, %p130
      %s133 = sadd.s32 %s132, 1
      %p136 = scmp.eq.s32.totalorder %s21, 1
      %p137 = scmp.ne.s32.totalorder %s132, %s134
      %p138 = scmp.eq.s32.totalorder %s21, 0
      %p139 = por %p137, %p138
      %p140 = scmp.ne.s32.totalorder %s132, %s134
      %p141 = scmp.eq.s32.totalorder %s26, 1
      %p142 = por %p140, %p141
      %p143 = scmp.ne.s32.totalorder %s134, %s135
      %p144 = scmp.eq.s32.totalorder %s26, 0
      %p145 = por %p143, %p144
      %p146 = scmp.ne.s32.totalorder %s134, %s135
      %p147 = scmp.eq.s32.totalorder %s27, 1
      %p148 = por %p146, %p147
      %p150 = scmp.ne.s32.totalorder %s135, %s149
      %p151 = scmp.eq.s32.totalorder %s27, 0
      %p152 = por %p150, %p151
      %s154 = sadd.s32 %s153, 1
      %p157 = scmp.eq.s32.totalorder %s21, 1
      %p158 = scmp.ne.s32.totalorder %s153, %s155
      %p159 = scmp.eq.s32.totalorder %s21, 0
      %p160 = por %p158, %p159
      %p161 = scmp.ne.s32.totalorder %s153, %s155
      %p162 = scmp.eq.s32.totalorder %s26, 1
      %p163 = por %p161, %p162
      %p164 = scmp.ne.s32.totalorder %s155, %s156
      %p165 = scmp.eq.s32.totalorder %s26, 0
      %p166 = por %p164, %p165
      %p167 = scmp.ne.s32.totalorder %s155, %s156
      %p168 = scmp.eq.s32.totalorder %s27, 1
      %p169 = por %p167, %p168
      %p171 = scmp.ne.s32.totalorder %s156, %s170
      %p172 = scmp.eq.s32.totalorder %s27, 0
      %p173 = por %p171, %p172
      %s175 = sadd.s32 %s174, 1
      %p178 = scmp.eq.s32.totalorder %s21, 1
      %p179 = scmp.ne.s32.totalorder %s174, %s176
      %p180 = scmp.eq.s32.totalorder %s21, 0
      %p181 = por %p179, %p180
      %p182 = scmp.ne.s32.totalorder %s174, %s176
      %p183 = scmp.eq.s32.totalorder %s26, 1
      %p184 = por %p182, %p183
      %p185 = scmp.ne.s32.totalorder %s176, %s177
      %p186 = scmp.eq.s32.totalorder %s26, 0
      %p187 = por %p185, %p186
      %p188 = scmp.ne.s32.totalorder %s176, %s177
      %p189 = scmp.eq.s32.totalorder %s27, 1
      %p190 = por %p188, %p189
      %p192 = scmp.ne.s32.totalorder %s177, %s191
      %p193 = scmp.eq.s32.totalorder %s27, 0
      %p194 = por %p192, %p193
      %s196 = sadd.s32 %s195, 1
      %p199 = scmp.eq.s32.totalorder %s21, 1
      %p200 = scmp.ne.s32.totalorder %s195, %s197
      %p201 = scmp.eq.s32.totalorder %s21, 0
      %p202 = por %p200, %p201
      %p203 = scmp.ne.s32.totalorder %s195, %s197
      %p204 = scmp.eq.s32.totalorder %s26, 1
      %p205 = por %p203, %p204
      %p206 = scmp.ne.s32.totalorder %s197, %s198
      %p207 = scmp.eq.s32.totalorder %s26, 0
      %p208 = por %p206, %p207
      %p209 = scmp.ne.s32.totalorder %s197, %s198
      %p210 = scmp.eq.s32.totalorder %s27, 1
      %p211 = por %p209, %p210
      %p213 = scmp.ne.s32.totalorder %s198, %s212
      %p214 = scmp.eq.s32.totalorder %s27, 0
      %p215 = por %p213, %p214
      %s217 = sadd.s32 %s216, 1
      %p220 = scmp.eq.s32.totalorder %s21, 1
      %p221 = scmp.ne.s32.totalorder %s216, %s218
      %p222 = scmp.eq.s32.totalorder %s21, 0
      %p223 = por %p221, %p222
      %p224 = scmp.ne.s32.totalorder %s216, %s218
      %p225 = scmp.eq.s32.totalorder %s26, 1
      %p226 = por %p224, %p225
      %p227 = scmp.ne.s32.totalorder %s218, %s219
      %p228 = scmp.eq.s32.totalorder %s26, 0
      %p229 = por %p227, %p228
      %p230 = scmp.ne.s32.totalorder %s218, %s219
      %p231 = scmp.eq.s32.totalorder %s27, 1
      %p232 = por %p230, %p231
      %p234 = scmp.ne.s32.totalorder %s219, %s233
      %p235 = scmp.eq.s32.totalorder %s27, 0
      %p236 = por %p234, %p235
      %s237 = ssub.s32 %s28, %s40
      %s238 = ssub.s32 %s29, %s36
      %s239 = sor.u32 %s237, %s238
      %p240 = scmp.eq.s32.totalorder %s239, 0
      %s242 = sadd.s32 %s241, 1
      %s243 = scalar_select %p240, %s241, %s242
      %p246 = pneg %p240
      %p247 = scmp.eq.s32.totalorder %s21, 1
      %p248 = por %p246, %p247
      %p249 = scmp.ne.s32.totalorder %s241, %s244
      %p250 = scmp.eq.s32.totalorder %s21, 0
      %p251 = por %p249, %p250
      %p252 = scmp.ne.s32.totalorder %s241, %s244
      %p253 = scmp.eq.s32.totalorder %s26, 1
      %p254 = por %p252, %p253
      %p255 = scmp.ne.s32.totalorder %s244, %s245
      %p256 = scmp.eq.s32.totalorder %s26, 0
      %p257 = por %p255, %p256
      %p258 = scmp.ne.s32.totalorder %s244, %s245
      %p259 = scmp.eq.s32.totalorder %s27, 1
      %p260 = por %p258, %p259
      %p262 = scmp.ne.s32.totalorder %s245, %s261
      %p263 = scmp.eq.s32.totalorder %s27, 0
      %p264 = por %p262, %p263
      %p265 = scmp.le.s32.totalorder 1, %s21
      %p266 = scmp.lt.s32.totalorder %s21, 3
      %p267 = pnand %p265, %p266
      %p268 = pneg %p267
      // Predicated region
      $region9: #{tpu_custom_call.1} parent=5 // pred_check
        _
      $region10: #{tpu_custom_call.1} parent=5 // pred_check_branch
        %270 = sbr.rel (%p267) target = $region12
      $region11: #{tpu_custom_call.1} parent=5 // pred_region
        %s271 = ssub.s32 %s21, 1
        // Predicated region
        $region13: #{tpu_custom_call.1} parent=11 // pred_check
          %p272 = pneg %p82
        $region14: #{tpu_custom_call.1} parent=11 // pred_check_branch
          %274 = sbr.rel (%p272) target = $region16
        $region15: #{tpu_custom_call.1} parent=11 // pred_region
          _
        $region16: #{tpu_custom_call.1} parent=11 // pred_fallthru
          _
        // Predicated region
        $region17: #{tpu_custom_call.1} parent=11 // pred_check
          %p275 = pneg %p103
        $region18: #{tpu_custom_call.1} parent=11 // pred_check_branch
          %277 = sbr.rel (%p275) target = $region20
        $region19: #{tpu_custom_call.1} parent=11 // pred_region
          _
        $region20: #{tpu_custom_call.1} parent=11 // pred_fallthru
          _
        // Predicated region
        $region21: #{tpu_custom_call.1} parent=11 // pred_check
          %p278 = pneg %p124
        $region22: #{tpu_custom_call.1} parent=11 // pred_check_branch
          %280 = sbr.rel (%p278) target = $region24
        $region23: #{tpu_custom_call.1} parent=11 // pred_region
          _
        $region24: #{tpu_custom_call.1} parent=11 // pred_fallthru
          _
        // Predicated region
        $region25: #{tpu_custom_call.1} parent=11 // pred_check
          %p281 = pneg %p145
        $region26: #{tpu_custom_call.1} parent=11 // pred_check_branch
          %283 = sbr.rel (%p281) target = $region28
        $region27: #{tpu_custom_call.1} parent=11 // pred_region
          _
        $region28: #{tpu_custom_call.1} parent=11 // pred_fallthru
          _
        // Predicated region
        $region29: #{tpu_custom_call.1} parent=11 // pred_check
          %p284 = pneg %p166
        $region30: #{tpu_custom_call.1} parent=11 // pred_check_branch
          %286 = sbr.rel (%p284) target = $region32
        $region31: #{tpu_custom_call.1} parent=11 // pred_region
          _
        $region32: #{tpu_custom_call.1} parent=11 // pred_fallthru
          _
        // Predicated region
        $region33: #{tpu_custom_call.1} parent=11 // pred_check
          %p287 = pneg %p187
        $region34: #{tpu_custom_call.1} parent=11 // pred_check_branch
          %289 = sbr.rel (%p287) target = $region36
        $region35: #{tpu_custom_call.1} parent=11 // pred_region
          _
        $region36: #{tpu_custom_call.1} parent=11 // pred_fallthru
          _
        // Predicated region
        $region37: #{tpu_custom_call.1} parent=11 // pred_check
          %p290 = pneg %p208
        $region38: #{tpu_custom_call.1} parent=11 // pred_check_branch
          %292 = sbr.rel (%p290) target = $region40
        $region39: #{tpu_custom_call.1} parent=11 // pred_region
          _
        $region40: #{tpu_custom_call.1} parent=11 // pred_fallthru
          _
        // Predicated region
        $region41: #{tpu_custom_call.1} parent=11 // pred_check
          %p293 = pneg %p229
        $region42: #{tpu_custom_call.1} parent=11 // pred_check_branch
          %295 = sbr.rel (%p293) target = $region44
        $region43: #{tpu_custom_call.1} parent=11 // pred_region
          _
        $region44: #{tpu_custom_call.1} parent=11 // pred_fallthru
          _
      $region12: #{tpu_custom_call.1} parent=5 // pred_fallthru
        _
      %p296 = scmp.lt.s32.totalorder %s21, 2
      // Predicated region
      $region45: #{tpu_custom_call.1} parent=5 // pred_check
        %p297 = pneg %p296
      $region46: #{tpu_custom_call.1} parent=5 // pred_check_branch
        %299 = sbr.rel (%p297) target = $region48
      $region47: #{tpu_custom_call.1} parent=5 // pred_region
        // Predicated region
        $region49: #{tpu_custom_call.1} parent=47 // pred_check
          %p300 = pneg %p55
        $region50: #{tpu_custom_call.1} parent=47 // pred_check_branch
          %302 = sbr.rel (%p300) target = $region52
        $region51: #{tpu_custom_call.1} parent=47 // pred_region
          %s303 = sand.u32 %s45, 1
          %s304 = scalar_lea.sflag [#allocation3], %s303
          %s305 = sand.u32 %s45, 1
          %s306 = smul.addr %s305, 8
          %s307 = scalar_lea.vmem [#allocation2], %s306
          %s308 = smul.u32 2, %s29
          %s310 = ssub.s32 128, 128
          %311 = vsyncadd %s304, %s310
          %s312 = smul.addr %s28, 2
          %s313 = sadd.s32 %s308, %s312
          %s314 = smul.addr %s313, 64
          %s315 = scalar_lea.hbm %s0, %s314
          %s317 = sshll.u32 %s307, 4
          %s318 = int_to_ptr.vmem [resolvable:$true] %s317
          %320 = dma.hbm_to_vmem [thread:$0]  %s315, 128, %s318, %s304
        $region52: #{tpu_custom_call.1} parent=47 // pred_fallthru
          _
      $region48: #{tpu_custom_call.1} parent=5 // pred_fallthru
        _
      %p321 = scmp.le.s32.totalorder 1, %s21
      %p322 = scmp.lt.s32.totalorder %s21, 3
      %p323 = pnand %p321, %p322
      %p324 = pneg %p323
      // Predicated region
      $region53: #{tpu_custom_call.1} parent=5 // pred_check
        _
      $region54: #{tpu_custom_call.1} parent=5 // pred_check_branch
        %326 = sbr.rel (%p323) target = $region56
      $region55: #{tpu_custom_call.1} parent=5 // pred_region
        %s327 = ssub.s32 %s21, 1
        %s328 = sand.u32 %s48, 1
        %s329 = scalar_lea.sflag [#allocation3], %s328
        %s330 = sand.u32 %s48, 1
        %s331 = smul.addr %s330, 8
        %s332 = scalar_lea.vmem [#allocation2], %s331
        // Predicated region
        $region57: #{tpu_custom_call.1} parent=55 // pred_check
          %p333 = pneg %p61
        $region58: #{tpu_custom_call.1} parent=55 // pred_check_branch
          %335 = sbr.rel (%p333) target = $region60
        $region59: #{tpu_custom_call.1} parent=55 // pred_region
          %336 = dma.done %s329, 128
        $region60: #{tpu_custom_call.1} parent=55 // pred_fallthru
          _
        %s337 = sand.u32 %s48, 1
        %s338 = scalar_lea.sflag [#allocation3], %s337
        %s339 = sand.u32 %s48, 1
        %s340 = smul.addr %s339, 8
        %s341 = scalar_lea.vmem [#allocation2], %s340
        %p342 = pneg %p61
        %p343 = pneg %p58
        %p344 = pneg %p82
        %p345 = pneg %p79
        %p346 = pneg %p103
        %p347 = pneg %p100
        %p348 = pneg %p124
        %p349 = pneg %p121
        %p350 = pneg %p145
        %p351 = pneg %p142
        %p352 = pneg %p166
        %p353 = pneg %p163
        %p354 = pneg %p187
        %p355 = pneg %p184
        %p356 = pneg %p208
        %p357 = pneg %p205
        %p358 = pneg %p229
        %p359 = pneg %p226
        %p360 = pneg %p257
        %p361 = pneg %p254
        %s362 = sand.u32 %s244, 1
        %s363 = scalar_lea.sflag [#allocation4], %s362
        %s364 = sand.u32 %s244, 1
        %s365 = smul.addr %s364, 8
        %s366 = scalar_lea.vmem [#allocation5], %s365
        %s367 = smul.u32 2, %s31
        %s368 = smul.u32 2, %s31
        %v369 = vld [vmem:[%s332] sm:$0xff]
        %v370 = vld [vmem:[%s1] sm:$0x3]
        %v371 = vld [vmem:[%s2] sm:$0x3]
        %v373 = vcombine.high %v369, %v369
        %vm374 = vcmask 31744
        %v376 = vsel %vm374, %v371, 0
        %vm378 = vcmask 1043456
        %v379 = vsel %vm378, %v369, 0
        %v381 = vsel %vm378, %v373, 0
        %383 = vmatprep.subr.mxu0 %v381
        %384 = vmatpush1.msra.mxu0 %v379
        %385 = vmatprep.subr.mxu0 0.0
        %386 = vmatpush1.msra.mxu0 0.0
        %387 = vmatprep.subr.mxu0 0.0
        %388 = vmatpush1.msra.mxu0 0.0
        %389 = vmatprep.subr.mxu0 0.0
        %390 = vmatpush1.msra.mxu0 0.0
        %391 = vmatprep.subr.mxu0 0.0
        %392 = vmatpush1.msra.mxu0 0.0
        %393 = vmatprep.subr.mxu0 0.0
        %394 = vmatpush1.msra.mxu0 0.0
        %395 = vmatprep.subr.mxu0 0.0
        %396 = vmatpush1.msra.mxu0 0.0
        %397 = vmatprep.subr.mxu0 0.0
        %398 = vmatpush1.msra.mxu0 0.0
        %399 = vmatprep.subr.mxu0 0.0
        %400 = vmatpush1.msra.mxu0 0.0
        %401 = vmatprep.subr.mxu0 0.0
        %402 = vmatpush1.msra.mxu0 0.0
        %403 = vmatprep.subr.mxu0 0.0
        %404 = vmatpush1.msra.mxu0 0.0
        %405 = vmatprep.subr.mxu0 0.0
        %406 = vmatpush1.msra.mxu0 0.0
        %407 = vmatprep.subr.mxu0 0.0
        %408 = vmatpush1.msra.mxu0 0.0
        %409 = vmatprep.subr.mxu0 0.0
        %410 = vmatpush1.msra.mxu0 0.0
        %411 = vmatprep.subr.mxu0 0.0
        %412 = vmatpush1.msra.mxu0 0.0
        %413 = vmatprep.subr.mxu0 0.0
        %414 = vmatpush1.msra.mxu0 0.0
        %415 = vmatprep.subr.mxu0 0.0
        %416 = vmatpush1.msra.mxu0 0.0
        %417 = vmatprep.subr.mxu0 0.0
        %418 = vmatpush1.msra.mxu0 0.0
        %419 = vmatprep.subr.mxu0 0.0
        %420 = vmatpush1.msra.mxu0 0.0
        %421 = vmatprep.subr.mxu0 0.0
        %422 = vmatpush1.msra.mxu0 0.0
        %423 = vmatprep.subr.mxu0 0.0
        %424 = vmatpush1.msra.mxu0 0.0
        %425 = vmatprep.subr.mxu0 0.0
        %426 = vmatpush1.msra.mxu0 0.0
        %427 = vmatprep.subr.mxu0 0.0
        %428 = vmatpush1.msra.mxu0 0.0
        %429 = vmatprep.subr.mxu0 0.0
        %430 = vmatpush1.msra.mxu0 0.0
        %431 = vmatprep.subr.mxu0 0.0
        %432 = vmatpush1.msra.mxu0 0.0
        %433 = vmatprep.subr.mxu0 0.0
        %434 = vmatpush1.msra.mxu0 0.0
        %435 = vmatprep.subr.mxu0 0.0
        %436 = vmatpush1.msra.mxu0 0.0
        %437 = vmatprep.subr.mxu0 0.0
        %438 = vmatpush1.msra.mxu0 0.0
        %439 = vmatprep.subr.mxu0 0.0
        %440 = vmatpush1.msra.mxu0 0.0
        %441 = vmatprep.subr.mxu0 0.0
        %442 = vmatpush1.msra.mxu0 0.0
        %443 = vmatprep.subr.mxu0 0.0
        %444 = vmatpush1.msra.mxu0 0.0
        %445 = vmatprep.subr.mxu0 0.0
        %446 = vmatpush1.msra.mxu0 0.0
        %447 = vmatprep.mubr.f32.mxu0 0.0
        %448 = vmatmul.mubr.f32.gmra.mrb[0].mxu0 %v376
        %v449 = vpop.f32.mrb[0].mxu0
        %v450 = vadd.f32 0.0, %v449
        %v451 = vpop.f32.mrb[0].mxu0
        %v452 = vadd.f32 0.0, %v451
        %453 = vdwg.mxu0
        %v454 = vld [vmem:[%s3] sm:$0x3]
        %vm455 = vcmask 15360
        %v457 = vsel %vm455, %v454, 0
        %vm459 = vcmask 1041408
        %v461 = vsel %vm459, %v450, 0
        %v464 = vsel %vm459, %v452, 0
        %466 = vmatprep.subr.mxu0 %v464
        %467 = vmatpush1.msra.mxu0 %v461
        %468 = vmatprep.subr.mxu0 0.0
        %469 = vmatpush1.msra.mxu0 0.0
        %470 = vmatprep.subr.mxu0 0.0
        %471 = vmatpush1.msra.mxu0 0.0
        %472 = vmatprep.subr.mxu0 0.0
        %473 = vmatpush1.msra.mxu0 0.0
        %474 = vmatprep.subr.mxu0 0.0
        %475 = vmatpush1.msra.mxu0 0.0
        %476 = vmatprep.subr.mxu0 0.0
        %477 = vmatpush1.msra.mxu0 0.0
        %478 = vmatprep.subr.mxu0 0.0
        %479 = vmatpush1.msra.mxu0 0.0
        %480 = vmatprep.subr.mxu0 0.0
        %481 = vmatpush1.msra.mxu0 0.0
        %482 = vmatprep.subr.mxu0 0.0
        %483 = vmatpush1.msra.mxu0 0.0
        %484 = vmatprep.subr.mxu0 0.0
        %485 = vmatpush1.msra.mxu0 0.0
        %486 = vmatprep.subr.mxu0 0.0
        %487 = vmatpush1.msra.mxu0 0.0
        %488 = vmatprep.subr.mxu0 0.0
        %489 = vmatpush1.msra.mxu0 0.0
        %490 = vmatprep.subr.mxu0 0.0
        %491 = vmatpush1.msra.mxu0 0.0
        %492 = vmatprep.subr.mxu0 0.0
        %493 = vmatpush1.msra.mxu0 0.0
        %494 = vmatprep.subr.mxu0 0.0
        %495 = vmatpush1.msra.mxu0 0.0
        %496 = vmatprep.subr.mxu0 0.0
        %497 = vmatpush1.msra.mxu0 0.0
        %498 = vmatprep.subr.mxu0 0.0
        %499 = vmatpush1.msra.mxu0 0.0
        %500 = vmatprep.subr.mxu0 0.0
        %501 = vmatpush1.msra.mxu0 0.0
        %502 = vmatprep.subr.mxu0 0.0
        %503 = vmatpush1.msra.mxu0 0.0
        %504 = vmatprep.subr.mxu0 0.0
        %505 = vmatpush1.msra.mxu0 0.0
        %506 = vmatprep.subr.mxu0 0.0
        %507 = vmatpush1.msra.mxu0 0.0
        %508 = vmatprep.subr.mxu0 0.0
        %509 = vmatpush1.msra.mxu0 0.0
        %510 = vmatprep.subr.mxu0 0.0
        %511 = vmatpush1.msra.mxu0 0.0
        %512 = vmatprep.subr.mxu0 0.0
        %513 = vmatpush1.msra.mxu0 0.0
        %514 = vmatprep.subr.mxu0 0.0
        %515 = vmatpush1.msra.mxu0 0.0
        %516 = vmatprep.subr.mxu0 0.0
        %517 = vmatpush1.msra.mxu0 0.0
        %518 = vmatprep.subr.mxu0 0.0
        %519 = vmatpush1.msra.mxu0 0.0
        %520 = vmatprep.subr.mxu0 0.0
        %521 = vmatpush1.msra.mxu0 0.0
        %522 = vmatprep.subr.mxu0 0.0
        %523 = vmatpush1.msra.mxu0 0.0
        %524 = vmatprep.subr.mxu0 0.0
        %525 = vmatpush1.msra.mxu0 0.0
        %526 = vmatprep.subr.mxu0 0.0
        %527 = vmatpush1.msra.mxu0 0.0
        %528 = vmatprep.subr.mxu0 0.0
        %529 = vmatpush1.msra.mxu0 0.0
        %530 = vmatprep.mubr.f32.mxu0 0.0
        %531 = vmatmul.mubr.f32.gmra.mrb[0].mxu0 %v457
        %v532 = vpop.f32.mrb[0].mxu0
        %v533 = vadd.f32 0.0, %v532
        %v534 = vpop.f32.mrb[0].mxu0
        %v535 = vadd.f32 0.0, %v534
        %536 = vdwg.mxu0
        %v538 = vsel %vm374, %v370, 0
        %540 = vmatprep.subr.mxu0 %v381
        %541 = vmatpush1.msra.mxu0 %v379
        %542 = vmatprep.subr.mxu0 0.0
        %543 = vmatpush1.msra.mxu0 0.0
        %544 = vmatprep.subr.mxu0 0.0
        %545 = vmatpush1.msra.mxu0 0.0
        %546 = vmatprep.subr.mxu0 0.0
        %547 = vmatpush1.msra.mxu0 0.0
        %548 = vmatprep.subr.mxu0 0.0
        %549 = vmatpush1.msra.mxu0 0.0
        %550 = vmatprep.subr.mxu0 0.0
        %551 = vmatpush1.msra.mxu0 0.0
        %552 = vmatprep.subr.mxu0 0.0
        %553 = vmatpush1.msra.mxu0 0.0
        %554 = vmatprep.subr.mxu0 0.0
        %555 = vmatpush1.msra.mxu0 0.0
        %556 = vmatprep.subr.mxu0 0.0
        %557 = vmatpush1.msra.mxu0 0.0
        %558 = vmatprep.subr.mxu0 0.0
        %559 = vmatpush1.msra.mxu0 0.0
        %560 = vmatprep.subr.mxu0 0.0
        %561 = vmatpush1.msra.mxu0 0.0
        %562 = vmatprep.subr.mxu0 0.0
        %563 = vmatpush1.msra.mxu0 0.0
        %564 = vmatprep.subr.mxu0 0.0
        %565 = vmatpush1.msra.mxu0 0.0
        %566 = vmatprep.subr.mxu0 0.0
        %567 = vmatpush1.msra.mxu0 0.0
        %568 = vmatprep.subr.mxu0 0.0
        %569 = vmatpush1.msra.mxu0 0.0
        %570 = vmatprep.subr.mxu0 0.0
        %571 = vmatpush1.msra.mxu0 0.0
        %572 = vmatprep.subr.mxu0 0.0
        %573 = vmatpush1.msra.mxu0 0.0
        %574 = vmatprep.subr.mxu0 0.0
        %575 = vmatpush1.msra.mxu0 0.0
        %576 = vmatprep.subr.mxu0 0.0
        %577 = vmatpush1.msra.mxu0 0.0
        %578 = vmatprep.subr.mxu0 0.0
        %579 = vmatpush1.msra.mxu0 0.0
        %580 = vmatprep.subr.mxu0 0.0
        %581 = vmatpush1.msra.mxu0 0.0
        %582 = vmatprep.subr.mxu0 0.0
        %583 = vmatpush1.msra.mxu0 0.0
        %584 = vmatprep.subr.mxu0 0.0
        %585 = vmatpush1.msra.mxu0 0.0
        %586 = vmatprep.subr.mxu0 0.0
        %587 = vmatpush1.msra.mxu0 0.0
        %588 = vmatprep.subr.mxu0 0.0
        %589 = vmatpush1.msra.mxu0 0.0
        %590 = vmatprep.subr.mxu0 0.0
        %591 = vmatpush1.msra.mxu0 0.0
        %592 = vmatprep.subr.mxu0 0.0
        %593 = vmatpush1.msra.mxu0 0.0
        %594 = vmatprep.subr.mxu0 0.0
        %595 = vmatpush1.msra.mxu0 0.0
        %596 = vmatprep.subr.mxu0 0.0
        %597 = vmatpush1.msra.mxu0 0.0
        %598 = vmatprep.subr.mxu0 0.0
        %599 = vmatpush1.msra.mxu0 0.0
        %600 = vmatprep.subr.mxu0 0.0
        %601 = vmatpush1.msra.mxu0 0.0
        %602 = vmatprep.subr.mxu0 0.0
        %603 = vmatpush1.msra.mxu0 0.0
        %604 = vmatprep.mubr.f32.mxu0 0.0
        %605 = vmatmul.mubr.f32.gmra.mrb[0].mxu0 %v538
        %v606 = vpop.f32.mrb[0].mxu0
        %v607 = vadd.f32 %v533, %v606
        %v608 = vpop.f32.mrb[0].mxu0
        %v609 = vadd.f32 %v535, %v608
        %610 = vdwg.mxu0
        %v611 = vld [vmem:[%s4] sm:$0x3]
        %613 = vset.pattern.permute.xlu0 0
        %614 = vperm.xlu0 %613, %v611
        %v615 = vpop.permute.xlu0 %614
        %v617 = vadd.f32 %v607, %v615
        %v618 = vadd.f32 %v609, %v615
        %v619 = vld [vmem:[%s5] sm:$0x3]
        %v620 = vld [vmem:[%s6] sm:$0x3]
        %622 = vset.pattern.permute.xlu0 0
        %623 = vperm.xlu0 %622, %v620
        %v624 = vpop.permute.xlu0 %623
        %v627 = vsel %vm455, %v619, 0
        %v630 = vsel %vm459, %v617, 0
        %v633 = vsel %vm459, %v618, 0
        %635 = vmatprep.subr.mxu0 %v633
        %636 = vmatpush1.msra.mxu0 %v630
        %637 = vmatprep.subr.mxu0 0.0
        %638 = vmatpush1.msra.mxu0 0.0
        %639 = vmatprep.subr.mxu0 0.0
        %640 = vmatpush1.msra.mxu0 0.0
        %641 = vmatprep.subr.mxu0 0.0
        %642 = vmatpush1.msra.mxu0 0.0
        %643 = vmatprep.subr.mxu0 0.0
        %644 = vmatpush1.msra.mxu0 0.0
        %645 = vmatprep.subr.mxu0 0.0
        %646 = vmatpush1.msra.mxu0 0.0
        %647 = vmatprep.subr.mxu0 0.0
        %648 = vmatpush1.msra.mxu0 0.0
        %649 = vmatprep.subr.mxu0 0.0
        %650 = vmatpush1.msra.mxu0 0.0
        %651 = vmatprep.subr.mxu0 0.0
        %652 = vmatpush1.msra.mxu0 0.0
        %653 = vmatprep.subr.mxu0 0.0
        %654 = vmatpush1.msra.mxu0 0.0
        %655 = vmatprep.subr.mxu0 0.0
        %656 = vmatpush1.msra.mxu0 0.0
        %657 = vmatprep.subr.mxu0 0.0
        %658 = vmatpush1.msra.mxu0 0.0
        %659 = vmatprep.subr.mxu0 0.0
        %660 = vmatpush1.msra.mxu0 0.0
        %661 = vmatprep.subr.mxu0 0.0
        %662 = vmatpush1.msra.mxu0 0.0
        %663 = vmatprep.subr.mxu0 0.0
        %664 = vmatpush1.msra.mxu0 0.0
        %665 = vmatprep.subr.mxu0 0.0
        %666 = vmatpush1.msra.mxu0 0.0
        %667 = vmatprep.subr.mxu0 0.0
        %668 = vmatpush1.msra.mxu0 0.0
        %669 = vmatprep.subr.mxu0 0.0
        %670 = vmatpush1.msra.mxu0 0.0
        %671 = vmatprep.subr.mxu0 0.0
        %672 = vmatpush1.msra.mxu0 0.0
        %673 = vmatprep.subr.mxu0 0.0
        %674 = vmatpush1.msra.mxu0 0.0
        %675 = vmatprep.subr.mxu0 0.0
        %676 = vmatpush1.msra.mxu0 0.0
        %677 = vmatprep.subr.mxu0 0.0
        %678 = vmatpush1.msra.mxu0 0.0
        %679 = vmatprep.subr.mxu0 0.0
        %680 = vmatpush1.msra.mxu0 0.0
        %681 = vmatprep.subr.mxu0 0.0
        %682 = vmatpush1.msra.mxu0 0.0
        %683 = vmatprep.subr.mxu0 0.0
        %684 = vmatpush1.msra.mxu0 0.0
        %685 = vmatprep.subr.mxu0 0.0
        %686 = vmatpush1.msra.mxu0 0.0
        %687 = vmatprep.subr.mxu0 0.0
        %688 = vmatpush1.msra.mxu0 0.0
        %689 = vmatprep.subr.mxu0 0.0
        %690 = vmatpush1.msra.mxu0 0.0
        %691 = vmatprep.subr.mxu0 0.0
        %692 = vmatpush1.msra.mxu0 0.0
        %693 = vmatprep.subr.mxu0 0.0
        %694 = vmatpush1.msra.mxu0 0.0
        %695 = vmatprep.subr.mxu0 0.0
        %696 = vmatpush1.msra.mxu0 0.0
        %697 = vmatprep.subr.mxu0 0.0
        %698 = vmatpush1.msra.mxu0 0.0
        %699 = vmatprep.mubr.f32.mxu0 0.0
        %700 = vmatmul.mubr.f32.gmra.mrb[0].mxu0 %v627
        %v701 = vpop.f32.mrb[0].mxu0
        %v702 = vadd.f32 %v624, %v701
        %v703 = vpop.f32.mrb[0].mxu0
        %v704 = vadd.f32 %v624, %v703
        %705 = vdwg.mxu0
        %v706 = vmul.f32 %v702, 0.5
        %v707 = vmul.f32 %v704, 0.5
        %v708 = vtanh.pop %v706
        %v709 = vtanh.pop %v707
        %v710 = vmul.f32 %v708, 0.8
        %v711 = vmul.f32 %v709, 0.8
        %v712 = vld [vmem:[%s7] sm:$0x3]
        %v713 = vld [vmem:[%s8] sm:$0x3]
        %715 = vset.pattern.permute.xlu0 0
        %716 = vperm.xlu0 %715, %v713
        %v717 = vpop.permute.xlu0 %716
        %v720 = vsel %vm455, %v712, 0
        %722 = vmatprep.subr.mxu0 %v633
        %723 = vmatpush1.msra.mxu0 %v630
        %724 = vmatprep.subr.mxu0 0.0
        %725 = vmatpush1.msra.mxu0 0.0
        %726 = vmatprep.subr.mxu0 0.0
        %727 = vmatpush1.msra.mxu0 0.0
        %728 = vmatprep.subr.mxu0 0.0
        %729 = vmatpush1.msra.mxu0 0.0
        %730 = vmatprep.subr.mxu0 0.0
        %731 = vmatpush1.msra.mxu0 0.0
        %732 = vmatprep.subr.mxu0 0.0
        %733 = vmatpush1.msra.mxu0 0.0
        %734 = vmatprep.subr.mxu0 0.0
        %735 = vmatpush1.msra.mxu0 0.0
        %736 = vmatprep.subr.mxu0 0.0
        %737 = vmatpush1.msra.mxu0 0.0
        %738 = vmatprep.subr.mxu0 0.0
        %739 = vmatpush1.msra.mxu0 0.0
        %740 = vmatprep.subr.mxu0 0.0
        %741 = vmatpush1.msra.mxu0 0.0
        %742 = vmatprep.subr.mxu0 0.0
        %743 = vmatpush1.msra.mxu0 0.0
        %744 = vmatprep.subr.mxu0 0.0
        %745 = vmatpush1.msra.mxu0 0.0
        %746 = vmatprep.subr.mxu0 0.0
        %747 = vmatpush1.msra.mxu0 0.0
        %748 = vmatprep.subr.mxu0 0.0
        %749 = vmatpush1.msra.mxu0 0.0
        %750 = vmatprep.subr.mxu0 0.0
        %751 = vmatpush1.msra.mxu0 0.0
        %752 = vmatprep.subr.mxu0 0.0
        %753 = vmatpush1.msra.mxu0 0.0
        %754 = vmatprep.subr.mxu0 0.0
        %755 = vmatpush1.msra.mxu0 0.0
        %756 = vmatprep.subr.mxu0 0.0
        %757 = vmatpush1.msra.mxu0 0.0
        %758 = vmatprep.subr.mxu0 0.0
        %759 = vmatpush1.msra.mxu0 0.0
        %760 = vmatprep.subr.mxu0 0.0
        %761 = vmatpush1.msra.mxu0 0.0
        %762 = vmatprep.subr.mxu0 0.0
        %763 = vmatpush1.msra.mxu0 0.0
        %764 = vmatprep.subr.mxu0 0.0
        %765 = vmatpush1.msra.mxu0 0.0
        %766 = vmatprep.subr.mxu0 0.0
        %767 = vmatpush1.msra.mxu0 0.0
        %768 = vmatprep.subr.mxu0 0.0
        %769 = vmatpush1.msra.mxu0 0.0
        %770 = vmatprep.subr.mxu0 0.0
        %771 = vmatpush1.msra.mxu0 0.0
        %772 = vmatprep.subr.mxu0 0.0
        %773 = vmatpush1.msra.mxu0 0.0
        %774 = vmatprep.subr.mxu0 0.0
        %775 = vmatpush1.msra.mxu0 0.0
        %776 = vmatprep.subr.mxu0 0.0
        %777 = vmatpush1.msra.mxu0 0.0
        %778 = vmatprep.subr.mxu0 0.0
        %779 = vmatpush1.msra.mxu0 0.0
        %780 = vmatprep.subr.mxu0 0.0
        %781 = vmatpush1.msra.mxu0 0.0
        %782 = vmatprep.subr.mxu0 0.0
        %783 = vmatpush1.msra.mxu0 0.0
        %784 = vmatprep.subr.mxu0 0.0
        %785 = vmatpush1.msra.mxu0 0.0
        %786 = vmatprep.mubr.f32.mxu0 0.0
        %787 = vmatmul.mubr.f32.gmra.mrb[0].mxu0 %v720
        %v788 = vpop.f32.mrb[0].mxu0
        %v789 = vadd.f32 %v717, %v788
        %v790 = vpop.f32.mrb[0].mxu0
        %v791 = vadd.f32 %v717, %v790
        %792 = vdwg.mxu0
        %v793 = vmul.f32 %v710, 1.442695
        %v794 = vpow.pop %v793
        %v795 = vmul.f32 %v711, 1.442695
        %v796 = vpow.pop %v795
        %v797 = vmul.f32 %v450, %v794
        %v798 = vmul.f32 %v452, %v796
        %v799 = vadd.f32 %v797, %v789
        %v800 = vadd.f32 %v798, %v791
        %v801 = vcombine.low %v617, %v618
        %803 = vst [vmem:[%s366] sm:$0x33] %v801
        %v806 = vcombine.low %v799, %v800
        %v807 = vrot.slane %v806, 6
        %809 = vst [vmem:[%s366] sm:$0xcc] %v807
        %s810 = sand.u32 %s244, 1
        %s811 = scalar_lea.sflag [#allocation4], %s810
        %s812 = sand.u32 %s244, 1
        %s813 = smul.addr %s812, 8
        %s814 = scalar_lea.vmem [#allocation5], %s813
        // Predicated region
        $region61: #{tpu_custom_call.1} parent=55 // pred_check
          %p815 = pneg %p254
        $region62: #{tpu_custom_call.1} parent=55 // pred_check_branch
          %817 = sbr.rel (%p815) target = $region64
        $region63: #{tpu_custom_call.1} parent=55 // pred_region
          %s818 = smul.u32 2, %s31
          %s820 = ssub.s32 128, 128
          %821 = vsyncadd %s811, %s820
          %s822 = smul.addr %s30, 2
          %s823 = sadd.s32 %s818, %s822
          %s824 = smul.addr %s823, 64
          %s825 = scalar_lea.hbm %s9, %s824
          %s827 = sshll.u32 %s814, 4
          %s828 = int_to_ptr.vmem [resolvable:$true] %s827
          %830 = dma.vmem_to_hbm [thread:$0]  %s828, 128, %s825, %s811
        $region64: #{tpu_custom_call.1} parent=55 // pred_fallthru
          _
      $region56: #{tpu_custom_call.1} parent=5 // pred_fallthru
        _
      %p831 = scmp.le.s32.totalorder 2, %s21
      // Predicated region
      $region65: #{tpu_custom_call.1} parent=5 // pred_check
        %p832 = pneg %p831
      $region66: #{tpu_custom_call.1} parent=5 // pred_check_branch
        %834 = sbr.rel (%p832) target = $region68
      $region67: #{tpu_custom_call.1} parent=5 // pred_region
        %s835 = ssub.s32 %s21, 2
        // Predicated region
        $region69: #{tpu_custom_call.1} parent=67 // pred_check
          %p836 = pneg %p260
        $region70: #{tpu_custom_call.1} parent=67 // pred_check_branch
          %838 = sbr.rel (%p836) target = $region72
        $region71: #{tpu_custom_call.1} parent=67 // pred_region
          %s839 = sand.u32 %s245, 1
          %s840 = scalar_lea.sflag [#allocation4], %s839
          %s841 = sand.u32 %s245, 1
          %s842 = smul.addr %s841, 8
          %s843 = scalar_lea.vmem [#allocation5], %s842
          %844 = dma.done %s840, 128
        $region72: #{tpu_custom_call.1} parent=67 // pred_fallthru
          _
      $region68: #{tpu_custom_call.1} parent=5 // pred_fallthru
        _
    $region6: #{tpu_custom_call.1} parent=1 // loop_footer
      %s25 = sadd.s32 1, %s21
    $region7: #{tpu_custom_call.1} parent=1 // loop_footer_branch
      %20 = sbr.rel target = $region3
    $region8: #{tpu_custom_call.1} parent=1 // loop_exit
      _
    %845 = vsyncpa [#allocation3], 1
    %s846 = scalar_lea.sflag [#allocation3], 1
    %847 = vsyncpa %s846, 1
    %848 = vsyncpa [#allocation4], 1
    %s849 = scalar_lea.sflag [#allocation4], 1
    %850 = vsyncpa %s849, 1

</llo_original>
